<compile_context>
chip_gen: v7x
topology: tpu7x:2x2x1
jax: 0.10.0
libtpu: 0.0.40
codegen_flags: <defaults>
</compile_context>

<pallas_src>
import functools

import jax
import jax.numpy as jnp
from jax.experimental import pallas as pl
from jax.experimental.pallas import tpu as pltpu

IGNORE_INDEX = -100
_NEG_PAD = -1e30  # finite "-inf" so online logsumexp never hits inf-inf


# --------------------------------------------------------------------------
# kernel
# --------------------------------------------------------------------------
def _ce_kernel(logits_ref, labels_ref, loss_ref, m_scr, l_scr, p_scr, *, tc, rem):
    # logits_ref: (TN, TC) native dtype (f32 / bf16) in VMEM
    # labels_ref: (TN, 1) int32 in VMEM
    # loss_ref  : (TN, 1) f32 per-row loss (resident across the class axis)
    # m/l/p_scr : (TN, 1) f32 scratch: running max, running sum, picked logit
    # tc        : static class-tile width
    # rem       : static #valid columns in the last class tile (0 -> none ragged)
    k = pl.program_id(1)
    nk = pl.num_programs(1)

    @pl.when(k == 0)
    def _init():
        m_scr[...] = jnp.full_like(m_scr, _NEG_PAD)
        l_scr[...] = jnp.zeros_like(l_scr)
        p_scr[...] = jnp.zeros_like(p_scr)

    lbl = labels_ref[...]                                   # (TN, 1) int32
    lbl_local = lbl - k * tc                                # (TN, 1) cheap shift
    col = jax.lax.broadcasted_iota(jnp.int32, (1, tc), 1)   # (1, TC), un-shifted
    x = logits_ref[...]                                     # (TN, TC) native dtype

    def update(x_nat):
        # row max + gather on native dtype (exact); exp path in f32.
        m_prev = m_scr[...]                                 # (TN, 1) f32
        tile_max = jnp.max(x_nat, axis=-1, keepdims=True).astype(jnp.float32)
        m_new = jnp.maximum(m_prev, tile_max)
        xf = x_nat.astype(jnp.float32)
        l_scr[...] = l_scr[...] * jnp.exp(m_prev - m_new) + jnp.sum(
            jnp.exp(xf - m_new), axis=-1, keepdims=True)
        m_scr[...] = m_new
        picked = jnp.sum(
            jnp.where(col == lbl_local, x_nat, jnp.asarray(0, x_nat.dtype)),
            axis=-1, keepdims=True).astype(jnp.float32)
        p_scr[...] += picked

    if rem == 0:
        # every class tile is fully valid -> no masking anywhere
        update(x)
    else:
        # interior tiles: mask-free hot path
        @pl.when(k != nk - 1)
        def _interior():
            update(x)

        # last (ragged) class tile: columns >= rem hold undefined data ->
        # neutralize them for max/exp.  The gather needs no mask: valid
        # labels never point past C, IGNORE labels never match the iota.
        @pl.when(k == nk - 1)
        def _last():
            neg = jnp.asarray(_NEG_PAD, dtype=x.dtype)
            update(jnp.where(col < rem, x, neg))

    @pl.when(k == nk - 1)
    def _finalize():
        lse = m_scr[...] + jnp.log(l_scr[...])              # (TN, 1)
        valid = lbl != IGNORE_INDEX
        loss_ref[...] = jnp.where(valid, lse - p_scr[...], 0.0)


# --------------------------------------------------------------------------
# wrapper
# --------------------------------------------------------------------------
def _round_up(x, m):
    return (x + m - 1) // m * m


def _cdiv(a, b):
    return (a + b - 1) // b


def _has_big_vmem():
    # v5e/v6e have 128 MiB of VMEM per TensorCore; v7x only 64 MiB.
    try:
        info = pltpu.get_tpu_info()
        return getattr(info, "vmem_capacity_bytes", 0) >= 128 * 1024 * 1024
    except Exception:
        return False


def _pick_tn(n, tn_cap):
    n8 = _round_up(max(n, 1), 8)
    tn = min(tn_cap, n8)
    if n8 >= 16:
        # ensure >= 2 batch blocks so both v7x TensorCores get work
        tn = min(tn, _round_up(_cdiv(n8, 2), 8))
    return max(tn, 8)


def cross_entropy_loss(logits, labels, *, tn_max=None, tc_max=None,
                       vmem_limit_bytes=None):
    """logits: (N, C) float (f32/bf16), labels: (N,) int. Scalar mean CE loss."""
    n, c = logits.shape
    labels = labels.astype(jnp.int32)
    itemsize = jnp.dtype(logits.dtype).itemsize
    big_vmem = _has_big_vmem()

    # ---- tile caps -------------------------------------------------------
    if tc_max is None:
        tc_cap = 2048 * max(1, 4 // max(1, itemsize))   # dtype-scaled (bf16: 2x)
        if big_vmem:
            tc_cap *= 2                                  # v5e/v6e: bigger tiles
    else:
        tc_cap = max(128, _round_up(tc_max, 128))
    tn_cap = max(8, _round_up(256 if tn_max is None else tn_max, 8))
    if vmem_limit_bytes is None:
        vmem_limit_bytes = (64 if big_vmem else 32) * 1024 * 1024

    # ---- tiling (ragged tiles, no big pads) ------------------------------
    tc = min(tc_cap, _round_up(c, 128))
    tn = _pick_tn(n, tn_cap)

    grid_n = _cdiv(n, tn) if n >= tn else 1
    n_out = grid_n * tn

    # pad ONLY when a tile exceeds the array extent (tiny: <=7 rows / <=127 cols)
    row_pad = tn - n if tn > n else 0
    col_pad = tc - c if tc > c else 0
    x = logits
    if row_pad or col_pad:
        x = jnp.pad(x, ((0, row_pad), (0, col_pad)), constant_values=_NEG_PAD)

    grid_c = _cdiv(c + col_pad, tc)
    rem = 0 if col_pad else (c % tc)          # 0 => no in-kernel ragged mask

    # labels are tiny: pad to the batch-block multiple with IGNORE_INDEX so
    # ragged batch rows are neutralized at finalize.
    lbl2d = labels.reshape(n, 1)
    if n_out != n:
        lbl2d = jnp.pad(lbl2d, ((0, n_out - n), (0, 0)),
                        constant_values=IGNORE_INDEX)

    per_row = pl.pallas_call(
        functools.partial(_ce_kernel, tc=tc, rem=rem),
        out_shape=jax.ShapeDtypeStruct((n_out, 1), jnp.float32),
        grid_spec=pltpu.PrefetchScalarGridSpec(
            num_scalar_prefetch=0,
            grid=(grid_n, grid_c),
            in_specs=[
                pl.BlockSpec((tn, tc), lambda i, k: (i, k)),   # logits tiles
                pl.BlockSpec((tn, 1), lambda i, k: (i, 0)),    # labels column
            ],
            out_specs=pl.BlockSpec((tn, 1), lambda i, k: (i, 0)),
            scratch_shapes=[pltpu.VMEM((tn, 1), jnp.float32)] * 3,
        ),
        compiler_params=pltpu.CompilerParams(
            dimension_semantics=("parallel", "arbitrary"),
            vmem_limit_bytes=vmem_limit_bytes,
        ),
    )(x, lbl2d)

    # reduction='mean' with ignore_index: divide by number of non-ignored rows.
    # (count == 0 -> NaN, matching PyTorch behavior.)
    total = jnp.sum(per_row)
    count = jnp.sum((labels != IGNORE_INDEX).astype(jnp.float32))
    return total / count


# --------------------------------------------------------------------------
# pure-JAX reference of nn.CrossEntropyLoss(ignore_index=-100, reduction='mean')
# --------------------------------------------------------------------------
def _reference(logits, labels):
    x = logits.astype(jnp.float32)
    lse = jax.nn.logsumexp(x, axis=-1)
    picked = jnp.take_along_axis(
        x, jnp.clip(labels, 0, x.shape[-1] - 1)[:, None], axis=-1
    )[:, 0]
    valid = labels != IGNORE_INDEX
    per_row = jnp.where(valid, lse - picked, 0.0)
    return jnp.sum(per_row) / jnp.sum(valid.astype(jnp.float32))


if __name__ == "__main__":
    key = jax.random.PRNGKey(0)
    k1, k2, k3, k4, k5, k6 = jax.random.split(key, 6)

    # --- test 1: small single-tile f32 case with an ignore_index row ---
    N, C = 8, 32
    logits = jax.random.normal(k1, (N, C), dtype=jnp.float32)
    labels = jax.random.randint(k2, (N,), 0, C, dtype=jnp.int32)
    labels = labels.at[3].set(IGNORE_INDEX)
    loss = jax.block_until_ready(cross_entropy_loss(logits, labels))
    ref = _reference(logits, labels)
    assert jnp.allclose(loss, ref, atol=1e-5, rtol=1e-5), (loss, ref)

    # --- test 2: multi class tiles + ragged last class tile (in-kernel mask) ---
    N2, C2 = 24, 200
    logits2 = jax.random.normal(k3, (N2, C2), dtype=jnp.float32) * 3.0
    labels2 = jax.random.randint(k4, (N2,), 0, C2, dtype=jnp.int32)
    labels2 = labels2.at[0].set(IGNORE_INDEX)
    labels2 = labels2.at[17].set(IGNORE_INDEX)
    loss2 = jax.block_until_ready(
        cross_entropy_loss(logits2, labels2, tn_max=8, tc_max=128))
    ref2 = _reference(logits2, labels2)
    assert jnp.allclose(loss2, ref2, atol=1e-4, rtol=1e-5), (loss2, ref2)

    # --- test 3: bf16 logits read natively, ragged class tile ---
    N3, C3 = 16, 130
    logits3 = jax.random.normal(k5, (N3, C3), dtype=jnp.float32).astype(jnp.bfloat16)
    labels3 = jax.random.randint(k6, (N3,), 0, C3, dtype=jnp.int32)
    labels3 = labels3.at[5].set(IGNORE_INDEX)
    loss3 = jax.block_until_ready(cross_entropy_loss(logits3, labels3, tc_max=128))
    ref3 = _reference(logits3.astype(jnp.float32), labels3)
    assert jnp.allclose(loss3, ref3, atol=2e-4, rtol=1e-4), (loss3, ref3)

    # --- test 4: ragged batch block (N not a multiple of the batch tile) ---
    N4, C4 = 20, 160
    logits4 = jax.random.normal(k1, (N4, C4), dtype=jnp.float32)
    labels4 = jax.random.randint(k2, (N4,), 0, C4, dtype=jnp.int32)
    labels4 = labels4.at[19].set(IGNORE_INDEX)
    loss4 = jax.block_until_ready(cross_entropy_loss(logits4, labels4, tc_max=128))
    ref4 = _reference(logits4, labels4)
    assert jnp.allclose(loss4, ref4, atol=1e-4, rtol=1e-5), (loss4, ref4)

    print("KERNEL_OK")
</pallas_src>

<mosaic_0001>
module attributes {stable_mosaic.version = 11 : i64} {
  func.func @_ce_kernel(%arg0: i32, %arg1: i32, %arg2: memref<8x128xf32, #tpu.memory_space<vmem>>, %arg3: memref<8x1xi32, #tpu.memory_space<vmem>>, %arg4: memref<8x1xf32, #tpu.memory_space<vmem>>, %arg5: memref<8x1xf32, #tpu.memory_space<vmem>>, %arg6: memref<8x1xf32, #tpu.memory_space<vmem>>, %arg7: memref<8x1xf32, #tpu.memory_space<vmem>>) attributes {dimension_semantics = [#tpu.dimension_semantics<parallel>, #tpu.dimension_semantics<arbitrary>], iteration_bounds = array<i64: 1, 1>, scalar_prefetch = 0 : i64, scratch_operands = 3 : i64, tpu.core_type = #tpu.core_type<tc>, window_params = [{transform_indices = @transform_0, window_bounds = array<i64: 8, 128>}, {transform_indices = @transform_1, window_bounds = array<i64: 8, 1>}, {transform_indices = @transform_2, window_bounds = array<i64: 8, 1>}]} {
    %c0_i32 = arith.constant 0 : i32
    %0 = arith.cmpi eq, %arg1, %c0_i32 : i32
    %1 = arith.extui %0 : i1 to i32
    %c0_i32_0 = arith.constant 0 : i32
    %2 = arith.cmpi ne, %1, %c0_i32_0 : i32
    scf.if %2 {
      %cst_21 = arith.constant -1.000000e+30 : f32
      %38 = vector.broadcast %cst_21 : f32 to vector<8x1xf32>
      %c0_22 = arith.constant 0 : index
      %c0_23 = arith.constant 0 : index
      %39 = vector.load %arg5[%c0_22, %c0_23] : memref<8x1xf32, #tpu.memory_space<vmem>>, vector<8x1xf32>
      tpu.vector_store %arg5[%c0_22, %c0_23], %38 {strides = array<i32>} : memref<8x1xf32, #tpu.memory_space<vmem>>, vector<8x1xf32>,
      %cst_24 = arith.constant 0.000000e+00 : f32
      %40 = vector.broadcast %cst_24 : f32 to vector<8x1xf32>
      %c0_25 = arith.constant 0 : index
      %c0_26 = arith.constant 0 : index
      %41 = vector.load %arg6[%c0_25, %c0_26] : memref<8x1xf32, #tpu.memory_space<vmem>>, vector<8x1xf32>
      tpu.vector_store %arg6[%c0_25, %c0_26], %40 {strides = array<i32>} : memref<8x1xf32, #tpu.memory_space<vmem>>, vector<8x1xf32>,
      %cst_27 = arith.constant 0.000000e+00 : f32
      %42 = vector.broadcast %cst_27 : f32 to vector<8x1xf32>
      %c0_28 = arith.constant 0 : index
      %c0_29 = arith.constant 0 : index
      %43 = vector.load %arg7[%c0_28, %c0_29] : memref<8x1xf32, #tpu.memory_space<vmem>>, vector<8x1xf32>
      tpu.vector_store %arg7[%c0_28, %c0_29], %42 {strides = array<i32>} : memref<8x1xf32, #tpu.memory_space<vmem>>, vector<8x1xf32>,
    } else {
    }
    %c0 = arith.constant 0 : index
    %c0_1 = arith.constant 0 : index
    %3 = vector.load %arg3[%c0, %c0_1] : memref<8x1xi32, #tpu.memory_space<vmem>>, vector<8x1xi32>
    %c128_i32 = arith.constant 128 : i32
    %4 = arith.muli %arg1, %c128_i32 : i32
    %5 = vector.broadcast %4 : i32 to vector<8x1xi32>
    %6 = arith.subi %3, %5 : vector<8x1xi32>
    %7 = tpu.iota {dimensions = array<i32: 1>} : vector<1x128xi32>
    %c0_2 = arith.constant 0 : index
    %c0_3 = arith.constant 0 : index
    %8 = vector.load %arg2[%c0_2, %c0_3] : memref<8x128xf32, #tpu.memory_space<vmem>>, vector<8x128xf32>
    %c0_4 = arith.constant 0 : index
    %c0_5 = arith.constant 0 : index
    %9 = vector.load %arg5[%c0_4, %c0_5] : memref<8x1xf32, #tpu.memory_space<vmem>>, vector<8x1xf32>
    %cst = arith.constant dense<0xFF800000> : vector<8xf32>
    %10 = vector.multi_reduction <maximumf>, %8, %cst [1] : vector<8x128xf32> to vector<8xf32>
    %11 = vector.shape_cast %10 : vector<8xf32> to vector<8x1xf32>
    %12 = arith.maximumf %9, %11 : vector<8x1xf32>
    %c0_6 = arith.constant 0 : index
    %c0_7 = arith.constant 0 : index
    %13 = vector.load %arg6[%c0_6, %c0_7] : memref<8x1xf32, #tpu.memory_space<vmem>>, vector<8x1xf32>
    %14 = arith.subf %9, %12 : vector<8x1xf32>
    %15 = math.exp %14 : vector<8x1xf32>
    %16 = arith.mulf %13, %15 : vector<8x1xf32>
    %17 = vector.broadcast %12 : vector<8x1xf32> to vector<8x128xf32>
    %18 = arith.subf %8, %17 : vector<8x128xf32>
    %19 = math.exp %18 : vector<8x128xf32>
    %cst_8 = arith.constant dense<0.000000e+00> : vector<8xf32>
    %20 = vector.multi_reduction <add>, %19, %cst_8 [1] : vector<8x128xf32> to vector<8xf32>
    %21 = vector.shape_cast %20 : vector<8xf32> to vector<8x1xf32>
    %22 = arith.addf %16, %21 : vector<8x1xf32>
    %c0_9 = arith.constant 0 : index
    %c0_10 = arith.constant 0 : index
    %23 = vector.load %arg6[%c0_9, %c0_10] : memref<8x1xf32, #tpu.memory_space<vmem>>, vector<8x1xf32>
    tpu.vector_store %arg6[%c0_9, %c0_10], %22 {strides = array<i32>} : memref<8x1xf32, #tpu.memory_space<vmem>>, vector<8x1xf32>,
    %c0_11 = arith.constant 0 : index
    %c0_12 = arith.constant 0 : index
    %24 = vector.load %arg5[%c0_11, %c0_12] : memref<8x1xf32, #tpu.memory_space<vmem>>, vector<8x1xf32>
    tpu.vector_store %arg5[%c0_11, %c0_12], %12 {strides = array<i32>} : memref<8x1xf32, #tpu.memory_space<vmem>>, vector<8x1xf32>,
    %25 = vector.broadcast %7 : vector<1x128xi32> to vector<8x128xi32>
    %26 = vector.broadcast %6 : vector<8x1xi32> to vector<8x128xi32>
    %27 = arith.cmpi eq, %25, %26 : vector<8x128xi32>
    %cst_13 = arith.constant 0.000000e+00 : f32
    %28 = vector.broadcast %cst_13 : f32 to vector<8x128xf32>
    %29 = arith.select %27, %8, %28 : vector<8x128xi1>, vector<8x128xf32>
    %cst_14 = arith.constant dense<0.000000e+00> : vector<8xf32>
    %30 = vector.multi_reduction <add>, %29, %cst_14 [1] : vector<8x128xf32> to vector<8xf32>
    %31 = vector.shape_cast %30 : vector<8xf32> to vector<8x1xf32>
    %c0_15 = arith.constant 0 : index
    %c0_16 = arith.constant 0 : index
    %32 = vector.load %arg7[%c0_15, %c0_16] : memref<8x1xf32, #tpu.memory_space<vmem>>, vector<8x1xf32>
    %33 = arith.addf %32, %31 : vector<8x1xf32>
    %c0_17 = arith.constant 0 : index
    %c0_18 = arith.constant 0 : index
    %34 = vector.load %arg7[%c0_17, %c0_18] : memref<8x1xf32, #tpu.memory_space<vmem>>, vector<8x1xf32>
    tpu.vector_store %arg7[%c0_17, %c0_18], %33 {strides = array<i32>} : memref<8x1xf32, #tpu.memory_space<vmem>>, vector<8x1xf32>,
    %c0_i32_19 = arith.constant 0 : i32
    %35 = arith.cmpi eq, %arg1, %c0_i32_19 : i32
    %36 = arith.extui %35 : i1 to i32
    %c0_i32_20 = arith.constant 0 : i32
    %37 = arith.cmpi ne, %36, %c0_i32_20 : i32
    scf.if %37 {
      %c0_21 = arith.constant 0 : index
      %c0_22 = arith.constant 0 : index
      %38 = vector.load %arg5[%c0_21, %c0_22] : memref<8x1xf32, #tpu.memory_space<vmem>>, vector<8x1xf32>
      %c0_23 = arith.constant 0 : index
      %c0_24 = arith.constant 0 : index
      %39 = vector.load %arg6[%c0_23, %c0_24] : memref<8x1xf32, #tpu.memory_space<vmem>>, vector<8x1xf32>
      %40 = math.log %39 : vector<8x1xf32>
      %41 = arith.addf %38, %40 : vector<8x1xf32>
      %c-100_i32 = arith.constant -100 : i32
      %42 = vector.broadcast %c-100_i32 : i32 to vector<8x1xi32>
      %43 = arith.cmpi ne, %3, %42 : vector<8x1xi32>
      %c0_25 = arith.constant 0 : index
      %c0_26 = arith.constant 0 : index
      %44 = vector.load %arg7[%c0_25, %c0_26] : memref<8x1xf32, #tpu.memory_space<vmem>>, vector<8x1xf32>
      %45 = arith.subf %41, %44 : vector<8x1xf32>
      %cst_27 = arith.constant 0.000000e+00 : f32
      %46 = vector.broadcast %cst_27 : f32 to vector<8x1xf32>
      %47 = arith.select %43, %45, %46 : vector<8x1xi1>, vector<8x1xf32>
      %c0_28 = arith.constant 0 : index
      %c0_29 = arith.constant 0 : index
      %48 = vector.load %arg4[%c0_28, %c0_29] : memref<8x1xf32, #tpu.memory_space<vmem>>, vector<8x1xf32>
      tpu.vector_store %arg4[%c0_28, %c0_29], %47 {strides = array<i32>} : memref<8x1xf32, #tpu.memory_space<vmem>>, vector<8x1xf32>,
    } else {
    }
    return
  }
  func.func @transform_0(%arg0: i32, %arg1: i32) -> (i32, i32) {
    %c0_i32 = arith.constant 0 : i32
    return %arg0, %arg1 : i32, i32
  }
  func.func @transform_1(%arg0: i32, %arg1: i32) -> (i32, i32) {
    %c0_i32 = arith.constant 0 : i32
    %c0_i32_0 = arith.constant 0 : i32
    return %arg0, %c0_i32 : i32, i32
  }
  func.func @transform_2(%arg0: i32, %arg1: i32) -> (i32, i32) {
    %c0_i32 = arith.constant 0 : i32
    %c0_i32_0 = arith.constant 0 : i32
    return %arg0, %c0_i32 : i32, i32
  }
}

</mosaic_0001>

<llo_original>
// kernel: tpu_custom_call.1
$region0: #{tpu_custom_call.1}
  #allocation0 [shape = 'u32[]', space=smem, size = 0x4, offset = 0x4, fixed_abs, tag = 'smem constant byte address 0x4 - core index']
  #allocation1 [shape = 'u32[144,128]{1,0:T(1,128)}', space=vmem, size = 0x12000, scoped, tag = 'internal scratch']
  #allocation2 [shape = 'f32[8,1]{1,0:T(8,128)}', space=vmem, size = 0x1000, scoped, tag = 'scratch operand']
  #allocation3 [shape = 'f32[8,1]{1,0:T(8,128)}', space=vmem, size = 0x1000, scoped, tag = 'scratch operand']
  #allocation4 [shape = 'f32[8,1]{1,0:T(8,128)}', space=vmem, size = 0x1000, scoped, tag = 'scratch operand']
  %s0 = inlined_call_operand.vmem [shape: f32[8,128], index: 0, kind: input, shape index: {}]
  %s1 = inlined_call_operand.vmem [shape: s32[8,1], index: 1, kind: input, shape index: {}]
  %s2 = inlined_call_operand.vmem [shape: f32[8,1], index: 2, kind: output, shape index: {}]
  %s3 = sld [smem:[#allocation0]]
  $region26: #{tpu_custom_call.1} parent=0
    _
  %s5 = ssub.s32 1, %s3
  %s6 = scalar_select 0, %s5, %s3
  // Predicated region
  $region2: #{tpu_custom_call.1} parent=0 // pred_check
    _
  $region3: #{tpu_custom_call.1} parent=0 // pred_check_branch
    %8 = sbr.rel (0) target = $region5
  $region4: #{tpu_custom_call.1} parent=0 // pred_region
    _
  $region5: #{tpu_custom_call.1} parent=0 // pred_fallthru
    _
  // Predicated region
  $region6: #{tpu_custom_call.1} parent=0 // pred_check
    _
  $region7: #{tpu_custom_call.1} parent=0 // pred_check_branch
    %10 = sbr.rel (0) target = $region9
  $region8: #{tpu_custom_call.1} parent=0 // pred_region
    _
  $region9: #{tpu_custom_call.1} parent=0 // pred_fallthru
    _
  %p11 = scmp.eq.s32.totalorder 0, 0
  // Predicated region
  $region10: #{tpu_custom_call.1} parent=0 // pred_check
    %p12 = pneg %p11
  $region11: #{tpu_custom_call.1} parent=0 // pred_check_branch
    %14 = sbr.rel (%p12) target = $region13
  $region12: #{tpu_custom_call.1} parent=0 // pred_region
    %vm15 = vcmask 7168
    %16 = vst.msk [vmem:[#allocation2] sm:$0xff] %vm15, -1e+30
    %17 = vst.msk [vmem:[#allocation3] sm:$0xff] %vm15, 0.0
    %18 = vst.msk [vmem:[#allocation4] sm:$0xff] %vm15, 0.0
  $region13: #{tpu_custom_call.1} parent=0 // pred_fallthru
    _
  %v19 = vld [vmem:[%s1] sm:$0xff]
  %s20 = smul.u32 0, 128
  %v21 = vstv %s20
  %v22 = vsub.s32 %v19, %v21
  %v23 = vlaneseq
  %v24 = vand.u32 %v23, 127
  %v25 = vld [vmem:[%s0] sm:$0xff]
  %v26 = vld [vmem:[#allocation2] sm:$0xff]
  %27 = vmax.xlane.f32.xlu0 %v25
  %v28 = vpop.xlane.xlu0 %27
  %v29 = vmax.f32 %v26, %v28
  %v30 = vld [vmem:[#allocation3] sm:$0xff]
  %v31 = vsub.f32 %v26, %v29
  %v32 = vmul.f32 %v31, 1.442695
  %v33 = vpow.pop %v32
  %v34 = vmul.f32 %v30, %v33
  %36 = vset.pattern.permute.xlu0 0
  %37 = vperm.xlu0 %36, %v29
  %v38 = vpop.permute.xlu0 %37
  %v40 = vsub.f32 %v25, %v38
  %v41 = vmul.f32 %v40, 1.442695
  %v42 = vpow.pop %v41
  %43 = vadd.xlane.f32.xlu0 %v42
  %v44 = vpop.xlane.xlu0 %43
  %v45 = vadd.f32 %v34, %v44
  %vm46 = vcmask 7168
  %47 = vst.msk [vmem:[#allocation3] sm:$0xff] %vm46, %v45
  %48 = vst.msk [vmem:[#allocation2] sm:$0xff] %vm46, %v29
  %49 = vset.pattern.permute.xlu0 0
  %50 = vperm.xlu0 %49, %v22
  %v51 = vpop.permute.xlu0 %50
  %vm52 = vcmp.eq.s32.totalorder %v24, %v51
  %v53 = vsel %vm52, %v25, 0.0
  %54 = vadd.xlane.f32.xlu0 %v53
  %v55 = vpop.xlane.xlu0 %54
  %v56 = vld [vmem:[#allocation4] sm:$0xff]
  %v57 = vadd.f32 %v56, %v55
  %58 = vst.msk [vmem:[#allocation4] sm:$0xff] %vm46, %v57
  // Predicated region
  $region14: #{tpu_custom_call.1} parent=0 // pred_check
    %p59 = pneg %p11
  $region15: #{tpu_custom_call.1} parent=0 // pred_check_branch
    %61 = sbr.rel (%p59) target = $region17
  $region16: #{tpu_custom_call.1} parent=0 // pred_region
    %v62 = vld [vmem:[#allocation2] sm:$0xff]
    %v63 = vld [vmem:[#allocation3] sm:$0xff]
    %v64 = vlog2.pop %v63
    %v65 = vmul.f32 %v64, 0.6931472
    %v66 = vadd.f32 %v62, %v65
    %vm67 = vcmp.ne.s32.totalorder %v19, 4294967196
    %v68 = vld [vmem:[#allocation4] sm:$0xff]
    %v69 = vsub.f32 %v66, %v68
    %v70 = vsel %vm67, %v69, 0.0
    %71 = vst.msk [vmem:[%s2] sm:$0xff] %vm46, %v70
  $region17: #{tpu_custom_call.1} parent=0 // pred_fallthru
    _
  // Predicated region
  $region18: #{tpu_custom_call.1} parent=0 // pred_check
    _
  $region19: #{tpu_custom_call.1} parent=0 // pred_check_branch
    %73 = sbr.rel (0) target = $region21
  $region20: #{tpu_custom_call.1} parent=0 // pred_region
    _
  $region21: #{tpu_custom_call.1} parent=0 // pred_fallthru
    _
  // Predicated region
  $region22: #{tpu_custom_call.1} parent=0 // pred_check
    _
  $region23: #{tpu_custom_call.1} parent=0 // pred_check_branch
    %75 = sbr.rel (0) target = $region25
  $region24: #{tpu_custom_call.1} parent=0 // pred_region
    _
  $region25: #{tpu_custom_call.1} parent=0 // pred_fallthru
    _

</llo_original>
